<compile_context>
chip_gen: v5e
topology: v5e:2x2
jax: 0.10.0
libtpu: 0.0.40
codegen_flags: <defaults>
</compile_context>

<pallas_src>
import math

import jax
import jax.numpy as jnp
from jax import lax
from jax.experimental import pallas as pl
from jax.experimental.pallas import tpu as pltpu

LMAX = 3
NUM_L = LMAX + 1                       # 4 radial / l blocks
NUM_LM = (LMAX + 1) ** 2               # 16 spherical-harmonic components
L_OF_LM = [l for l in range(NUM_L) for _ in range(2 * l + 1)]   # lm -> l


def _ceil_to(x, m):
    return -(-x // m) * m


# --------------------------------------------------------------------------------------
# kernel 0: linear_up  (node_feats @ W_up), tiled over node rows
# --------------------------------------------------------------------------------------
def _up_kernel(nf_ref, w_ref, o_ref):
    o_ref[...] = jnp.dot(nf_ref[...], w_ref[...], preferred_element_type=jnp.float32)


# --------------------------------------------------------------------------------------
# fused kernel: per-node-block edge gather/accumulate + composed per-l/per-element mix
# --------------------------------------------------------------------------------------
def _make_fused_kernel(edge_chunk, node_block, num_channels, num_elements):
    rows = node_block * NUM_LM

    def kernel(send_ref, lrecv_ref, cnt_ref,        # SMEM (scalar prefetch), int32
               r_ref,                               # VMEM block [edge_chunk, 4, C]   (radial R)
               y_ref,                               # VMEM block [edge_chunk, 16]     (spherical Y)
               up_ref,                              # VMEM [n_pad, C]                 (resident)
               gate_ref,                            # VMEM block [rows, NE]           (node attrs)
               wstack_ref,                          # VMEM [4, NE*C, C]               (resident)
               out_ref,                             # VMEM block [rows, C]
               msg_scr,                             # VMEM scratch [rows, C]
               ry_scr):                             # VMEM scratch [edge_chunk, 16, C]
        i = pl.program_id(0)                        # node block
        j = pl.program_id(1)                        # edge chunk within block
        cpb = pl.num_programs(1)

        @pl.when(j == 0)
        def _init():
            msg_scr[...] = jnp.zeros_like(msg_scr)

        # skip chunks that are entirely capacity padding for this node block
        @pl.when(j * edge_chunk < cnt_ref[i])
        def _accumulate():
            # ---- vectorized Y*R fold for the whole chunk (off the serial edge chain) ----
            r = r_ref[...]                                           # [ec, 4, C]
            y = y_ref[...]                                           # [ec, 16]
            lmv = lax.broadcasted_iota(jnp.int32, (NUM_LM, 1), 0)    # [16, 1]
            rep = jnp.zeros((edge_chunk, NUM_LM, num_channels), jnp.float32)
            for l in range(NUM_L):
                m = jnp.logical_and(lmv >= l * l, lmv < (l + 1) * (l + 1))
                rep = rep + m.astype(jnp.float32)[None] * r[:, l:l + 1, :]
            ry_scr[...] = rep * y[:, :, None]                        # [ec, 16, C]

            base = (i * cpb + j) * edge_chunk

            # ---- receiver-sorted run accumulation: flush only when the receiver changes ----
            def edge_step(t, carry):
                acc, prev = carry                                    # acc [16, C], prev i32
                slot = base + t
                s = send_ref[slot]
                rloc = lrecv_ref[slot]
                changed = rloc != prev

                @pl.when(changed)
                def _flush():
                    row = pl.multiple_of(prev * NUM_LM, NUM_LM)
                    msg_scr[pl.ds(row, NUM_LM), :] = (
                        msg_scr[pl.ds(row, NUM_LM), :] + acc)

                acc = acc * (1.0 - changed.astype(jnp.float32))
                sf = up_ref[pl.ds(s, 1), :]                          # [1, C] sender features
                acc = acc + ry_scr[t] * sf                           # [16, C]
                return acc, rloc

            acc0 = jnp.zeros((NUM_LM, num_channels), jnp.float32)
            prev0 = lrecv_ref[base]
            acc, prev = lax.fori_loop(0, edge_chunk, edge_step, (acc0, prev0),
                                      unroll=8)
            row = pl.multiple_of(prev * NUM_LM, NUM_LM)
            msg_scr[pl.ds(row, NUM_LM), :] = msg_scr[pl.ds(row, NUM_LM), :] + acc

        # ---- composed (W_lin @ W_skip) per-l mixing with element K-stacking ----
        @pl.when(j == cpb - 1)
        def _mix():
            x = msg_scr[...]                                         # [rows, C]
            g = gate_ref[...]                                        # [rows, NE]
            # general ElementalLinear semantics: weighted sum over elements (deep-K stack)
            xg = jnp.concatenate([g[:, e:e + 1] * x for e in range(num_elements)],
                                 axis=-1)                            # [rows, NE*C]
            lm = lax.broadcasted_iota(jnp.int32, (rows, 1), 0) % NUM_LM
            lrow = ((lm >= 1).astype(jnp.int32) + (lm >= 4).astype(jnp.int32)
                    + (lm >= 9).astype(jnp.int32))
            out = jnp.zeros((rows, num_channels), jnp.float32)
            for l in range(NUM_L):
                yv = jnp.dot(xg, wstack_ref[l], preferred_element_type=jnp.float32)
                out = out + (lrow == l).astype(jnp.float32) * yv     # disjoint row masks
            out_ref[...] = out

    return kernel


# --------------------------------------------------------------------------------------
# wrapper
# --------------------------------------------------------------------------------------
def invariant_interaction(node_attrs, node_feats, edge_attrs, edge_feats, edge_index,
                          w_up, w_lin, w_skip, avg_num_neighbors,
                          *, edge_chunk=128, node_block=8):
    """Returns (message [N, NUM_LM, C], None), matching the PyTorch module.

    NOTE: the wrapper builds a receiver-sorted, per-node-block bucketed edge layout with a
    concrete (eager) max-degree capacity -> do not wrap this function in jax.jit.
    """
    assert node_block % 8 == 0, "node_block must be a multiple of 8"
    N, C = node_feats.shape
    E = edge_attrs.shape[0]
    NE = node_attrs.shape[1]

    sender = edge_index[1].astype(jnp.int32)
    receiver = edge_index[0].astype(jnp.int32)

    n_pad = max(_ceil_to(N, node_block), node_block)
    num_blocks = n_pad // node_block

    # ---- receiver-sorted, per-node-block bucketed (CSR-like) edge layout --------------
    order = jnp.argsort(receiver)
    recv_s = receiver[order]
    send_s = sender[order]
    y_s = edge_attrs.astype(jnp.float32)[order]                        # [E, 16]
    r_s = edge_feats.astype(jnp.float32).reshape(E, NUM_L, C)[order]   # [E, 4, C]

    blk = recv_s // node_block                                         # non-decreasing
    start = jnp.searchsorted(blk, jnp.arange(num_blocks))
    counts = jnp.searchsorted(blk, jnp.arange(num_blocks) + 1) - start
    pos = jnp.arange(E) - start[blk]

    if E > 0:
        cap = max(int(_ceil_to(int(jax.device_get(counts.max())), edge_chunk)), edge_chunk)
    else:
        cap = edge_chunk
    cpb = cap // edge_chunk
    slots = num_blocks * cap

    dest = blk * cap + pos
    send_d = jnp.zeros((slots,), jnp.int32).at[dest].set(send_s)
    lrecv_d = jnp.zeros((slots,), jnp.int32).at[dest].set(recv_s % node_block)
    y_d = jnp.zeros((slots, NUM_LM), jnp.float32).at[dest].set(y_s)
    r_d = jnp.zeros((slots, NUM_L, C), jnp.float32).at[dest].set(r_s)
    counts_i = counts.astype(jnp.int32)

    node_feats_p = jnp.pad(node_feats.astype(jnp.float32), ((0, n_pad - N), (0, 0)))
    attrs_p = jnp.pad(node_attrs.astype(jnp.float32), ((0, n_pad - N), (0, 0)))
    gate = jnp.repeat(attrs_p, NUM_LM, axis=0)                         # [n_pad*16, NE]

    # Compose the two linear stages + fold every scale constant:
    #   Wcomb[l, e] = W_lin[l] @ W_skip[e, l] * 1/(sqrt(C) * avg) * 1/sqrt(C)
    scale = 1.0 / (C * float(avg_num_neighbors))
    wstack = (jnp.einsum('lck,elkd->lecd', w_lin.astype(jnp.float32),
                         w_skip.astype(jnp.float32)) * scale).reshape(NUM_L, NE * C, C)

    # ---- kernel 0: linear_up -----------------------------------------------------------
    up_rows = node_block
    for cand in (512, 256, 128, 64, 32, 16, 8):
        if n_pad % cand == 0:
            up_rows = cand
            break
    up = pl.pallas_call(
        _up_kernel,
        out_shape=jax.ShapeDtypeStruct((n_pad, C), jnp.float32),
        grid=(n_pad // up_rows,),
        in_specs=[pl.BlockSpec((up_rows, C), lambda i: (i, 0)),
                  pl.BlockSpec((C, C), lambda i: (0, 0))],
        out_specs=pl.BlockSpec((up_rows, C), lambda i: (i, 0)),
        compiler_params=pltpu.CompilerParams(dimension_semantics=("parallel",)),
    )(node_feats_p, w_up.astype(jnp.float32))

    # ---- fused kernel: gather-accumulate + mix, pipelined per-node-block output --------
    out2d = pl.pallas_call(
        _make_fused_kernel(edge_chunk, node_block, C, NE),
        out_shape=jax.ShapeDtypeStruct((n_pad * NUM_LM, C), jnp.float32),
        grid_spec=pltpu.PrefetchScalarGridSpec(
            num_scalar_prefetch=3,
            grid=(num_blocks, cpb),
            in_specs=[
                pl.BlockSpec((edge_chunk, NUM_L, C), lambda i, j, *_: (i * cpb + j, 0, 0)),
                pl.BlockSpec((edge_chunk, NUM_LM), lambda i, j, *_: (i * cpb + j, 0)),
                pl.BlockSpec((n_pad, C), lambda i, j, *_: (0, 0)),                  # up (resident)
                pl.BlockSpec((node_block * NUM_LM, NE), lambda i, j, *_: (i, 0)),   # gate
                pl.BlockSpec((NUM_L, NE * C, C), lambda i, j, *_: (0, 0, 0)),       # wstack
            ],
            out_specs=pl.BlockSpec((node_block * NUM_LM, C), lambda i, j, *_: (i, 0)),
            scratch_shapes=[pltpu.VMEM((node_block * NUM_LM, C), jnp.float32),
                            pltpu.VMEM((edge_chunk, NUM_LM, C), jnp.float32)],
        ),
        compiler_params=pltpu.CompilerParams(
            dimension_semantics=("parallel", "arbitrary")),
    )(send_d, lrecv_d, counts_i, r_d, y_d, up, gate, wstack)

    # node-major layout -> [N, 16, C] is a pure reshape (no transpose)
    message = out2d[: N * NUM_LM].reshape(N, NUM_LM, C)
    return message, None


# --------------------------------------------------------------------------------------
# pure-JAX reference
# --------------------------------------------------------------------------------------
def reference(node_attrs, node_feats, edge_attrs, edge_feats, edge_index,
              w_up, w_lin, w_skip, avg_num_neighbors):
    N, C = node_feats.shape
    E = edge_attrs.shape[0]
    sender = edge_index[1]
    receiver = edge_index[0]
    l_idx = jnp.asarray(L_OF_LM)

    up = node_feats @ w_up
    ef = edge_feats.reshape(E, NUM_L, C)[:, l_idx, :]                       # [E,16,C]
    contrib = edge_attrs[:, :, None] * ef * up[sender][:, None, :]          # [E,16,C]
    msg = jnp.zeros((N, NUM_LM, C), jnp.float32).at[receiver].add(contrib)  # scatter-sum
    lin = jnp.einsum('nkc,kcd->nkd', msg, w_lin[l_idx]) / math.sqrt(C) / avg_num_neighbors
    wn = jnp.einsum('ne,elcd->nlcd', node_attrs, w_skip)[:, l_idx]          # [N,16,C,C]
    out = jnp.einsum('nkc,nkcd->nkd', lin, wn) / math.sqrt(C)
    return out


if __name__ == "__main__":
    N, E, C, NE = 8, 16, 128, 4          # nodes, edges, channels, chemical elements
    AVG_NUM_NEIGHBORS = 8.0

    key = jax.random.PRNGKey(0)
    ks = jax.random.split(key, 8)

    elem = jax.random.randint(ks[0], (N,), 0, NE)
    node_attrs = jax.nn.one_hot(elem, NE, dtype=jnp.float32)                # [N, NE]
    node_feats = jax.random.normal(ks[1], (N, C), jnp.float32)              # [N, C]
    edge_attrs = jax.random.normal(ks[2], (E, NUM_LM), jnp.float32)         # [E, 16]  spherical harmonics
    edge_feats = jax.random.normal(ks[3], (E, NUM_L * C), jnp.float32)      # [E, 4*C] radial features
    edge_index = jax.random.randint(ks[4], (2, E), 0, N, dtype=jnp.int32)   # [2, E]

    # deterministic synthetic parameters (shapes per module __init__)
    w_up = jax.random.normal(ks[5], (C, C), jnp.float32) / math.sqrt(C)     # linear_matmul: W / sqrt(C_in)
    w_lin = jax.random.normal(ks[6], (NUM_L, C, C), jnp.float32)            # e3nn Linear: per-l [C, C]
    # skip_tp weight [lmax+1, C, NE, C] -> permute(2,0,1,3) -> [NE, lmax+1, C, C], / sqrt(NE)
    w_skip = jax.random.normal(ks[7], (NE, NUM_L, C, C), jnp.float32) / math.sqrt(NE)

    out, _ = invariant_interaction(node_attrs, node_feats, edge_attrs, edge_feats,
                                   edge_index, w_up, w_lin, w_skip, AVG_NUM_NEIGHBORS,
                                   edge_chunk=128, node_block=8)
    out = jax.block_until_ready(out)

    ref = reference(node_attrs, node_feats, edge_attrs, edge_feats,
                    edge_index, w_up, w_lin, w_skip, AVG_NUM_NEIGHBORS)

    assert out.shape == (N, NUM_LM, C), out.shape
    assert bool(jnp.all(jnp.isfinite(out)))
    assert bool(jnp.allclose(out, ref, rtol=1e-2, atol=1e-3)), \
        float(jnp.max(jnp.abs(out - ref)))
    print("KERNEL_OK")
</pallas_src>

<mosaic_0001>
module attributes {stable_mosaic.version = 11 : i64} {
  func.func @_up_kernel(%arg0: i32, %arg1: memref<8x128xf32, #tpu.memory_space<vmem>>, %arg2: memref<128x128xf32, #tpu.memory_space<vmem>>, %arg3: memref<8x128xf32, #tpu.memory_space<vmem>>) attributes {dimension_semantics = [#tpu.dimension_semantics<parallel>], iteration_bounds = array<i64: 1>, scalar_prefetch = 0 : i64, scratch_operands = 0 : i64, tpu.core_type = #tpu.core_type<tc>, window_params = [{transform_indices = @transform_0, window_bounds = array<i64: 8, 128>}, {pipeline_mode = #tpu.pipeline_mode<synchronous>, transform_indices = @transform_1, window_bounds = array<i64: 128, 128>}, {transform_indices = @transform_2, window_bounds = array<i64: 8, 128>}]} {
    %c0 = arith.constant 0 : index
    %c0_0 = arith.constant 0 : index
    %0 = vector.load %arg1[%c0, %c0_0] : memref<8x128xf32, #tpu.memory_space<vmem>>, vector<8x128xf32>
    %c0_1 = arith.constant 0 : index
    %c0_2 = arith.constant 0 : index
    %1 = vector.load %arg2[%c0_1, %c0_2] : memref<128x128xf32, #tpu.memory_space<vmem>>, vector<128x128xf32>
    %cst = arith.constant dense<0.000000e+00> : vector<8x128xf32>
    %2 = tpu.matmul %0, %1, %cst {dimension_numbers = #tpu.dot_dimension_numbers<[1], [0], [0], [1], [0, 0, 1, 1], [], []>} : vector<8x128xf32>, vector<128x128xf32>, vector<8x128xf32> -> vector<8x128xf32>
    %c0_3 = arith.constant 0 : index
    %c0_4 = arith.constant 0 : index
    %3 = vector.load %arg3[%c0_3, %c0_4] : memref<8x128xf32, #tpu.memory_space<vmem>>, vector<8x128xf32>
    tpu.vector_store %arg3[%c0_3, %c0_4], %2 {strides = array<i32>} : memref<8x128xf32, #tpu.memory_space<vmem>>, vector<8x128xf32>,
    return
  }
  func.func @transform_0(%arg0: i32) -> (i32, i32) {
    %c0_i32 = arith.constant 0 : i32
    %c0_i32_0 = arith.constant 0 : i32
    return %arg0, %c0_i32 : i32, i32
  }
  func.func @transform_1(%arg0: i32) -> (i32, i32) {
    %c0_i32 = arith.constant 0 : i32
    %c0_i32_0 = arith.constant 0 : i32
    %c0_i32_1 = arith.constant 0 : i32
    return %c0_i32, %c0_i32_0 : i32, i32
  }
  func.func @transform_2(%arg0: i32) -> (i32, i32) {
    %c0_i32 = arith.constant 0 : i32
    %c0_i32_0 = arith.constant 0 : i32
    return %arg0, %c0_i32 : i32, i32
  }
}

</mosaic_0001>

<llo_original>
// kernel: tpu_custom_call.1
$region0: #{tpu_custom_call.1}
  #allocation0 [shape = 'u32[]', space=smem, size = 0x4, offset = 0x4, fixed_abs, tag = 'smem constant byte address 0x4 - core index']
  #allocation1 [shape = 'u32[72,128]{1,0:T(1,128)}', space=vmem, size = 0x9000, scoped, tag = 'internal scratch']
  %s0 = inlined_call_operand.hbm [shape: f32[8,128], index: 0, kind: input, shape index: {}]
  %s1 = inlined_call_operand.hbm [shape: f32[128,128], index: 1, kind: input, shape index: {}]
  %s2 = inlined_call_operand.hbm [shape: f32[8,128], index: 2, kind: output, shape index: {}]
  %s3 = sld [smem:[#allocation0]]
  $region26: #{tpu_custom_call.1} parent=0
    _
  %s5 = ssub.s32 1, %s3
  %s6 = scalar_select 0, %s5, %s3
  $region1: #{tpu_custom_call.1} parent=0
    #allocation2 [shape = 'u8[4096]{0}', space=vmem, size = 0x1000, scoped, tag = 'input window, operand 0, single buffered']
    #allocation3 [shape = 's32[1]{0}', space=sflag, size = 0x4, scoped, tag = 'scoped memory for tpu_custom_call.1']
    #allocation4 [shape = 's32[1]{0}', space=sflag, size = 0x4, scoped, tag = 'scoped memory for tpu_custom_call.1']
    #allocation5 [shape = 'u8[65536]{0}', space=vmem, size = 0x10000, scoped, tag = 'input window, operand 1, single buffered']
    #allocation6 [shape = 's32[1]{0}', space=sflag, size = 0x4, scoped, tag = 'scoped memory for tpu_custom_call.1']
    #allocation7 [shape = 'u8[4096]{0}', space=vmem, size = 0x1000, scoped, tag = 'output window, operand 0, single buffered']
    %7 = vsyncpa [#allocation3], 0
    %8 = vsyncpa [#allocation6], 0
    %9 = vsyncpa [#allocation4], 0
    // Predicated region
    $region2: #{tpu_custom_call.1} parent=1 // pred_check
      _
    $region3: #{tpu_custom_call.1} parent=1 // pred_check_branch
      %11 = sbr.rel (0) target = $region5
    $region4: #{tpu_custom_call.1} parent=1 // pred_region
      %13 = vsyncadd [#allocation3], 0
      %s15 = sshll.u32 %s0, 4
      %s16 = int_to_ptr.hbm [resolvable:$true] %s15
      %s17 = sshll.u32 [#allocation2], 4
      %s18 = int_to_ptr.vmem [resolvable:$true] %s17
      %20 = dma.hbm_to_vmem [thread:$0]  %s16, 128, %s18, [#allocation3]
    $region5: #{tpu_custom_call.1} parent=1 // pred_fallthru
      _
    // Predicated region
    $region6: #{tpu_custom_call.1} parent=1 // pred_check
      _
    $region7: #{tpu_custom_call.1} parent=1 // pred_check_branch
      %22 = sbr.rel (0) target = $region9
    $region8: #{tpu_custom_call.1} parent=1 // pred_region
      %24 = vsyncadd [#allocation6], 0
      %s25 = sshll.u32 %s1, 4
      %s26 = int_to_ptr.hbm [resolvable:$true] %s25
      %s27 = sshll.u32 [#allocation5], 4
      %s28 = int_to_ptr.vmem [resolvable:$true] %s27
      %33 = dma.hbm_to_vmem [thread:$0]  %s26, 2048, %s28, [#allocation6], 128, 128, 8
    $region9: #{tpu_custom_call.1} parent=1 // pred_fallthru
      _
    // Predicated region
    $region10: #{tpu_custom_call.1} parent=1 // pred_check
      _
    $region11: #{tpu_custom_call.1} parent=1 // pred_check_branch
      %35 = sbr.rel (0) target = $region13
    $region12: #{tpu_custom_call.1} parent=1 // pred_region
      %37 = dma.done [#allocation3], 128
    $region13: #{tpu_custom_call.1} parent=1 // pred_fallthru
      _
    // Predicated region
    $region14: #{tpu_custom_call.1} parent=1 // pred_check
      _
    $region15: #{tpu_custom_call.1} parent=1 // pred_check_branch
      %39 = sbr.rel (0) target = $region17
    $region16: #{tpu_custom_call.1} parent=1 // pred_region
      %41 = dma.done [#allocation6], 2048
    $region17: #{tpu_custom_call.1} parent=1 // pred_fallthru
      _
    %v42 = vld [vmem:[#allocation2] sm:$0xff]
    %v43 = vld [vmem:[#allocation5] sm:$0xff]
    %v44 = vld [vmem:[#allocation5 + $0x8] sm:$0xff]
    %v45 = vld [vmem:[#allocation5 + $0x10] sm:$0xff]
    %v46 = vld [vmem:[#allocation5 + $0x18] sm:$0xff]
    %v47 = vld [vmem:[#allocation5 + $0x20] sm:$0xff]
    %v48 = vld [vmem:[#allocation5 + $0x28] sm:$0xff]
    %v49 = vld [vmem:[#allocation5 + $0x30] sm:$0xff]
    %v50 = vld [vmem:[#allocation5 + $0x38] sm:$0xff]
    %v51 = vld [vmem:[#allocation5 + $0x40] sm:$0xff]
    %v52 = vld [vmem:[#allocation5 + $0x48] sm:$0xff]
    %v53 = vld [vmem:[#allocation5 + $0x50] sm:$0xff]
    %v54 = vld [vmem:[#allocation5 + $0x58] sm:$0xff]
    %v55 = vld [vmem:[#allocation5 + $0x60] sm:$0xff]
    %v56 = vld [vmem:[#allocation5 + $0x68] sm:$0xff]
    %v57 = vld [vmem:[#allocation5 + $0x70] sm:$0xff]
    %v58 = vld [vmem:[#allocation5 + $0x78] sm:$0xff]
    %59 = vmatpush.msra.mxu0 %v58
    %60 = vmatpush.msra.mxu0 %v57
    %61 = vmatpush.msra.mxu0 %v56
    %62 = vmatpush.msra.mxu0 %v55
    %63 = vmatpush.msra.mxu0 %v54
    %64 = vmatpush.msra.mxu0 %v53
    %65 = vmatpush.msra.mxu0 %v52
    %66 = vmatpush.msra.mxu0 %v51
    %67 = vmatpush.msra.mxu0 %v50
    %68 = vmatpush.msra.mxu0 %v49
    %69 = vmatpush.msra.mxu0 %v48
    %70 = vmatpush.msra.mxu0 %v47
    %71 = vmatpush.msra.mxu0 %v46
    %72 = vmatpush.msra.mxu0 %v45
    %73 = vmatpush.msra.mxu0 %v44
    %74 = vmatpush.msra.mxu0 %v43
    %75 = vmatmul.f32.gmra.mxu0 %v42
    %v76 = vpop.f32.mrf.mxu0
    %v77 = vadd.f32 0.0, %v76
    %78 = vdwg.mxu0
    %79 = vst [vmem:[#allocation7] sm:$0xff] %v77
    // Predicated region
    $region18: #{tpu_custom_call.1} parent=1 // pred_check
      _
    $region19: #{tpu_custom_call.1} parent=1 // pred_check_branch
      %81 = sbr.rel (0) target = $region21
    $region20: #{tpu_custom_call.1} parent=1 // pred_region
      %83 = vsyncadd [#allocation4], 0
      %s85 = sshll.u32 [#allocation7], 4
      %s86 = int_to_ptr.vmem [resolvable:$true] %s85
      %s87 = sshll.u32 %s2, 4
      %s88 = int_to_ptr.hbm [resolvable:$true] %s87
      %90 = dma.vmem_to_hbm [thread:$0]  %s86, 128, %s88, [#allocation4]
    $region21: #{tpu_custom_call.1} parent=1 // pred_fallthru
      _
    // Predicated region
    $region22: #{tpu_custom_call.1} parent=1 // pred_check
      _
    $region23: #{tpu_custom_call.1} parent=1 // pred_check_branch
      %92 = sbr.rel (0) target = $region25
    $region24: #{tpu_custom_call.1} parent=1 // pred_region
      %94 = dma.done [#allocation4], 128
    $region25: #{tpu_custom_call.1} parent=1 // pred_fallthru
      _
    %95 = vsyncpa [#allocation3], 1
    %96 = vsyncpa [#allocation6], 1
    %97 = vsyncpa [#allocation4], 1

</llo_original>
